<compile_context>
chip_gen: v6e
topology: v6e:2x2x1
jax: 0.10.0
libtpu: 0.0.40
codegen_flags: <defaults>
</compile_context>

<pallas_src>
import functools
import math

import jax
import jax.numpy as jnp
from jax.experimental import pallas as pl
from jax.experimental.pallas import tpu as pltpu

D_MODEL = 512  # matches `d_model = 512` in the PyTorch spec

_VMEM_LIMIT_BYTES = 32 * 1024 * 1024    # explicit scoped-VMEM budget (all gens)
_VMEM_BLOCK_BUDGET = 24 * 1024 * 1024   # 4 * block (double-buffered in + out)


# ------------------------- kernel -------------------------

def _layer_norm_kernel(x_ref, gamma_ref, beta_ref, o_ref, *, eps: float):
    # x_ref: (tR, D); gamma_ref/beta_ref: (1, D).  Per-row LayerNorm over D.
    x = x_ref[...].astype(jnp.float32)
    mean = jnp.mean(x, axis=-1, keepdims=True)
    xc = x - mean
    var = jnp.mean(xc * xc, axis=-1, keepdims=True)        # biased var (torch)
    inv = jax.lax.rsqrt(var + eps)                          # EUP, off the VALU path
    y = xc * inv * gamma_ref[...].astype(jnp.float32) \
        + beta_ref[...].astype(jnp.float32)
    o_ref[...] = y.astype(o_ref.dtype)


# ------------------------- tiling -------------------------

def _choose_row_tile(rows: int, row_tile: int, itemsize: int) -> int:
    """Pick a sublane-aligned row tile that (a) fits the VMEM budget,
    (b) gives >= 2 grid steps when possible (v7x megacore), and (c) keeps the
    last block from being mostly padding."""
    align = 16 if itemsize <= 2 else 8            # bf16 packs 16 sublanes/vreg
    # Cap: 2x double-buffered (input + output) blocks must fit the budget.
    vmem_cap = max(align, _VMEM_BLOCK_BUDGET // (4 * D_MODEL * itemsize))
    vmem_cap = (vmem_cap // align) * align
    row_tile = min(row_tile, vmem_cap)

    if rows <= row_tile:
        if rows >= 2 * align:
            # Split into two aligned blocks so both v7x TensorCores get work.
            half = -(-(rows // 2) // align) * align
            return max(align, min(half, row_tile))
        return rows                               # full extent: always legal
    # Large input: balance block sizes across the grid.
    n_steps = -(-rows // row_tile)                # cdiv
    t = -(-rows // n_steps)                       # balanced rows per step
    t = -(-t // align) * align                    # round up to sublane multiple
    return min(t, row_tile)


# ------------------------- wrappers -------------------------

def layer_norm(x: jnp.ndarray,
               gamma: jnp.ndarray,
               beta: jnp.ndarray,
               *,
               eps: float = 1e-5,
               row_tile: int = 2048) -> jnp.ndarray:
    """LayerNorm over the last dim of x (any leading shape), Pallas on TPU."""
    orig_shape = x.shape
    D = orig_shape[-1]
    assert D % 128 == 0, "d_model must be a multiple of 128 for lane-dense stores"

    rows = math.prod(orig_shape[:-1])
    x2 = x.reshape(rows, D)                       # lane-dense (rows, D) slab
    gamma2 = gamma.reshape(1, D).astype(jnp.float32)
    beta2 = beta.reshape(1, D).astype(jnp.float32)

    itemsize = jnp.dtype(x.dtype).itemsize
    tR = _choose_row_tile(rows, row_tile, itemsize)
    grid = (pl.cdiv(rows, tR),)

    cost = pl.CostEstimate(
        flops=8 * rows * D,                       # sub, sq, two means, scale, shift
        transcendentals=rows,                     # one rsqrt per row
        bytes_accessed=2 * rows * D * itemsize + 2 * D * 4,
    )

    kernel = functools.partial(_layer_norm_kernel, eps=float(eps))
    out = pl.pallas_call(
        kernel,
        out_shape=jax.ShapeDtypeStruct((rows, D), x.dtype),
        grid=grid,
        in_specs=[
            pl.BlockSpec((tR, D), lambda i: (i, 0)),
            pl.BlockSpec((1, D), lambda i: (0, 0)),
            pl.BlockSpec((1, D), lambda i: (0, 0)),
        ],
        out_specs=pl.BlockSpec((tR, D), lambda i: (i, 0)),
        compiler_params=pltpu.CompilerParams(
            dimension_semantics=("parallel",),
            vmem_limit_bytes=_VMEM_LIMIT_BYTES,
            allow_input_fusion=[True, False, False],
        ),
        cost_estimate=cost,
    )(x2, gamma2, beta2)
    return out.reshape(orig_shape)


def encoder_forward(x, mask, layers, gamma, beta, *, eps: float = 1e-5):
    """Encoder.forward: apply each layer(x, mask), then the final LayerNorm."""
    # TODO(synk): the encoder sub-layers inside the nn.ModuleList (self-attn,
    # FFN, ...) are not defined in the spec; they are treated as opaque
    # plain-JAX callables here, and only the final LayerNorm runs in Pallas.
    for layer in layers:
        x = layer(x, mask)
    return layer_norm(x, gamma, beta, eps=eps)


# ------------------------- demo -------------------------

def _make_demo_layer(key, scale: float = 0.02):
    """Stand-in encoder layer (plain JAX glue) so the final norm is non-trivial."""
    w = scale * jax.random.normal(key, (D_MODEL, D_MODEL), dtype=jnp.float32)

    def layer(x, mask):
        del mask  # demo layer ignores the mask
        return x + jnp.tanh(x @ w)

    return layer


def _ref_layer_norm(x, gamma, beta, eps=1e-5):
    xf = x.astype(jnp.float32)
    mean = jnp.mean(xf, axis=-1, keepdims=True)
    var = jnp.mean((xf - mean) ** 2, axis=-1, keepdims=True)
    return (xf - mean) / jnp.sqrt(var + eps) * gamma + beta


if __name__ == "__main__":
    B, S = 2, 8                                   # small shapes; d_model fixed = 512
    key = jax.random.PRNGKey(0)
    kx, kl1, kl2, kg, kb = jax.random.split(key, 5)

    x = jax.random.normal(kx, (B, S, D_MODEL), dtype=jnp.float32)
    mask = jnp.ones((B, 1, S, S), dtype=jnp.float32)
    layers = [_make_demo_layer(kl1), _make_demo_layer(kl2)]
    gamma = 1.0 + 0.05 * jax.random.normal(kg, (D_MODEL,), dtype=jnp.float32)
    beta = 0.05 * jax.random.normal(kb, (D_MODEL,), dtype=jnp.float32)

    # Pallas forward (jitted so producer fusion into the Pallas input applies).
    @jax.jit
    def fwd(xx):
        return encoder_forward(xx, mask, layers, gamma, beta)

    y = jax.block_until_ready(fwd(x))
    assert y.shape == (B, S, D_MODEL)

    # Plain-JAX reference (same layers + torch-style LayerNorm).
    h = x
    for layer in layers:
        h = layer(h, mask)
    ref = _ref_layer_norm(h, gamma, beta)
    assert jnp.allclose(y, ref, atol=1e-4, rtol=1e-4), "mismatch vs reference"

    # Multi-tile, ragged last block (rows = 2100 not a multiple of the tile).
    x_big = jax.random.normal(jax.random.PRNGKey(1), (3, 700, D_MODEL),
                              dtype=jnp.float32)
    y_big = jax.block_until_ready(layer_norm(x_big, gamma, beta))
    ref_big = _ref_layer_norm(x_big, gamma, beta)
    assert jnp.allclose(y_big, ref_big, atol=1e-4, rtol=1e-4), "tiled mismatch"

    # bf16 I/O path (stats in f32 inside the kernel), ragged rows as well.
    x_bf = jax.random.normal(jax.random.PRNGKey(2), (2, 100, D_MODEL),
                             dtype=jnp.bfloat16)
    y_bf = jax.block_until_ready(layer_norm(x_bf, gamma, beta))
    assert y_bf.dtype == jnp.bfloat16
    ref_bf = _ref_layer_norm(x_bf, gamma, beta)
    assert jnp.allclose(y_bf.astype(jnp.float32), ref_bf,
                        atol=5e-2, rtol=5e-2), "bf16 mismatch"

    print("KERNEL_OK")
</pallas_src>

<mosaic_0001>
module attributes {stable_mosaic.version = 11 : i64} {
  func.func @_layer_norm_kernel(%arg0: i32, %arg1: memref<8x512xf32, #tpu.memory_space<vmem>>, %arg2: memref<1x512xf32, #tpu.memory_space<vmem>>, %arg3: memref<1x512xf32, #tpu.memory_space<vmem>>, %arg4: memref<8x512xf32, #tpu.memory_space<vmem>>) attributes {dimension_semantics = [#tpu.dimension_semantics<parallel>], iteration_bounds = array<i64: 2>, scalar_prefetch = 0 : i64, scratch_operands = 0 : i64, tpu.core_type = #tpu.core_type<tc>, window_params = [{transform_indices = @transform_0, window_bounds = array<i64: 8, 512>}, {pipeline_mode = #tpu.pipeline_mode<synchronous>, transform_indices = @transform_1, window_bounds = array<i64: 1, 512>}, {pipeline_mode = #tpu.pipeline_mode<synchronous>, transform_indices = @transform_2, window_bounds = array<i64: 1, 512>}, {transform_indices = @transform_3, window_bounds = array<i64: 8, 512>}]} {
    %c0 = arith.constant 0 : index
    %c0_0 = arith.constant 0 : index
    %0 = vector.load %arg1[%c0, %c0_0] : memref<8x512xf32, #tpu.memory_space<vmem>>, vector<8x512xf32>
    %cst = arith.constant dense<0.000000e+00> : vector<8xf32>
    %1 = vector.multi_reduction <add>, %0, %cst [1] : vector<8x512xf32> to vector<8xf32>
    %2 = vector.shape_cast %1 : vector<8xf32> to vector<8x1xf32>
    %cst_1 = arith.constant 5.120000e+02 : f32
    %3 = vector.broadcast %cst_1 : f32 to vector<8x1xf32>
    %4 = arith.divf %2, %3 : vector<8x1xf32>
    %5 = vector.broadcast %4 : vector<8x1xf32> to vector<8x512xf32>
    %6 = arith.subf %0, %5 : vector<8x512xf32>
    %7 = arith.mulf %6, %6 : vector<8x512xf32>
    %cst_2 = arith.constant dense<0.000000e+00> : vector<8xf32>
    %8 = vector.multi_reduction <add>, %7, %cst_2 [1] : vector<8x512xf32> to vector<8xf32>
    %9 = vector.shape_cast %8 : vector<8xf32> to vector<8x1xf32>
    %cst_3 = arith.constant 5.120000e+02 : f32
    %10 = vector.broadcast %cst_3 : f32 to vector<8x1xf32>
    %11 = arith.divf %9, %10 : vector<8x1xf32>
    %cst_4 = arith.constant 9.99999974E-6 : f32
    %12 = vector.broadcast %cst_4 : f32 to vector<8x1xf32>
    %13 = arith.addf %11, %12 : vector<8x1xf32>
    %14 = math.rsqrt %13 : vector<8x1xf32>
    %15 = vector.broadcast %14 : vector<8x1xf32> to vector<8x512xf32>
    %16 = arith.mulf %6, %15 : vector<8x512xf32>
    %c0_5 = arith.constant 0 : index
    %c0_6 = arith.constant 0 : index
    %17 = vector.load %arg2[%c0_5, %c0_6] : memref<1x512xf32, #tpu.memory_space<vmem>>, vector<1x512xf32>
    %18 = vector.broadcast %17 : vector<1x512xf32> to vector<8x512xf32>
    %19 = arith.mulf %16, %18 : vector<8x512xf32>
    %c0_7 = arith.constant 0 : index
    %c0_8 = arith.constant 0 : index
    %20 = vector.load %arg3[%c0_7, %c0_8] : memref<1x512xf32, #tpu.memory_space<vmem>>, vector<1x512xf32>
    %21 = vector.broadcast %20 : vector<1x512xf32> to vector<8x512xf32>
    %22 = arith.addf %19, %21 : vector<8x512xf32>
    %c0_9 = arith.constant 0 : index
    %c0_10 = arith.constant 0 : index
    %23 = vector.load %arg4[%c0_9, %c0_10] : memref<8x512xf32, #tpu.memory_space<vmem>>, vector<8x512xf32>
    tpu.vector_store %arg4[%c0_9, %c0_10], %22 {strides = array<i32>} : memref<8x512xf32, #tpu.memory_space<vmem>>, vector<8x512xf32>,
    return
  }
  func.func @transform_0(%arg0: i32) -> (i32, i32) {
    %c0_i32 = arith.constant 0 : i32
    %c0_i32_0 = arith.constant 0 : i32
    return %arg0, %c0_i32 : i32, i32
  }
  func.func @transform_1(%arg0: i32) -> (i32, i32) {
    %c0_i32 = arith.constant 0 : i32
    %c0_i32_0 = arith.constant 0 : i32
    %c0_i32_1 = arith.constant 0 : i32
    return %c0_i32, %c0_i32_0 : i32, i32
  }
  func.func @transform_2(%arg0: i32) -> (i32, i32) {
    %c0_i32 = arith.constant 0 : i32
    %c0_i32_0 = arith.constant 0 : i32
    %c0_i32_1 = arith.constant 0 : i32
    return %c0_i32, %c0_i32_0 : i32, i32
  }
  func.func @transform_3(%arg0: i32) -> (i32, i32) {
    %c0_i32 = arith.constant 0 : i32
    %c0_i32_0 = arith.constant 0 : i32
    return %arg0, %c0_i32 : i32, i32
  }
}

</mosaic_0001>

<llo_original>
// kernel: fwd.1
$region0: #{fwd.1}
  #allocation0 [shape = 'u32[]', space=smem, size = 0x4, offset = 0x4, fixed_abs, tag = 'smem constant byte address 0x4 - core index']
  #allocation1 [shape = 'u32[144,128]{1,0:T(1,128)}', space=vmem, size = 0x12000, scoped, tag = 'internal scratch']
  %s0 = inlined_call_operand.vmem [shape: f32[16,512], index: 0, kind: input, shape index: {}]
  %s1 = inlined_call_operand.vmem [shape: f32[1,512], index: 1, kind: input, shape index: {}]
  %s2 = inlined_call_operand.vmem [shape: f32[1,512], index: 2, kind: input, shape index: {}]
  %s3 = inlined_call_operand.hbm [shape: f32[16,512], index: 3, kind: output, shape index: {}]
  %s4 = sld [smem:[#allocation0]]
  $region45: #{fwd.1} parent=0
    _
  %s6 = ssub.s32 1, %s4
  %s7 = scalar_select 0, %s6, %s4
  $region1: #{fwd.1} parent=0
    #allocation2 [shape = 'u8[32768]{0}', space=vmem, size = 0x8000, scoped, tag = 'output window, operand 0']
    #allocation3 [shape = 's32[2]{0}', space=sflag, size = 0x8, scoped, tag = 'scoped memory for fwd.1']
    %8 = vsyncpa [#allocation3], 0
    %s9 = scalar_lea.sflag [#allocation3], 1
    %10 = vsyncpa %s9, 0
    loop: start=0, step=1, limit=4
    $region2: #{fwd.1} parent=1 // loop_pre_header
      _
    $region3: #{fwd.1} parent=1 // loop_header
      %s12 = sphi 0, %s16
      %p13 = scmp.ge.s32.totalorder %s12, 4
      %s22 = sphi 0, %s24
      %s25 = sphi 0, %s22
      %s26 = sphi 0, %s25
      %s42 = sphi 0, %s26
      %s46 = sphi 0, %s46
      %s48 = sphi 0, %s46
      %s49 = sphi 0, %s48
      %s63 = sphi 0, %s49
      %s67 = sphi 0, %s67
      %s69 = sphi 0, %s67
      %s70 = sphi 0, %s69
      %s84 = sphi 0, %s70
      %s90 = sphi 0, %s92
      %s93 = sphi 0, %s90
      %s94 = sphi 0, %s93
      %s110 = sphi 0, %s94
    $region4: #{fwd.1} parent=1 // loop_header_branch
      %15 = sbr.rel (%p13) target = $region8
    $region5: #{fwd.1} parent=1 // loop_body
      %s17 = ssub.s32 %s12, 1
      %s18 = ssub.s32 %s12, 2
      %s19 = sadd.s32 %s12, 1
      %s20 = ssub.s32 %s12, %s19
      %p21 = scmp.eq.s32.totalorder %s20, 0
      %s23 = sadd.s32 %s22, 1
      %s24 = scalar_select %p21, %s22, %s23
      %p27 = pneg %p21
      %p28 = scmp.eq.s32.totalorder %s12, 1
      %p29 = por %p27, %p28
      %p30 = scmp.ne.s32.totalorder %s22, %s25
      %p31 = scmp.eq.s32.totalorder %s12, 0
      %p32 = por %p30, %p31
      %p33 = scmp.ne.s32.totalorder %s22, %s25
      %p34 = scmp.eq.s32.totalorder %s17, 1
      %p35 = por %p33, %p34
      %p36 = scmp.ne.s32.totalorder %s25, %s26
      %p37 = scmp.eq.s32.totalorder %s17, 0
      %p38 = por %p36, %p37
      %p39 = scmp.ne.s32.totalorder %s25, %s26
      %p40 = scmp.eq.s32.totalorder %s18, 1
      %p41 = por %p39, %p40
      %p43 = scmp.ne.s32.totalorder %s26, %s42
      %p44 = scmp.eq.s32.totalorder %s18, 0
      %p45 = por %p43, %p44
      %s47 = sadd.s32 %s46, 1
      %p50 = scmp.eq.s32.totalorder %s12, 1
      %p51 = scmp.ne.s32.totalorder %s46, %s48
      %p52 = scmp.eq.s32.totalorder %s12, 0
      %p53 = por %p51, %p52
      %p54 = scmp.ne.s32.totalorder %s46, %s48
      %p55 = scmp.eq.s32.totalorder %s17, 1
      %p56 = por %p54, %p55
      %p57 = scmp.ne.s32.totalorder %s48, %s49
      %p58 = scmp.eq.s32.totalorder %s17, 0
      %p59 = por %p57, %p58
      %p60 = scmp.ne.s32.totalorder %s48, %s49
      %p61 = scmp.eq.s32.totalorder %s18, 1
      %p62 = por %p60, %p61
      %p64 = scmp.ne.s32.totalorder %s49, %s63
      %p65 = scmp.eq.s32.totalorder %s18, 0
      %p66 = por %p64, %p65
      %s68 = sadd.s32 %s67, 1
      %p71 = scmp.eq.s32.totalorder %s12, 1
      %p72 = scmp.ne.s32.totalorder %s67, %s69
      %p73 = scmp.eq.s32.totalorder %s12, 0
      %p74 = por %p72, %p73
      %p75 = scmp.ne.s32.totalorder %s67, %s69
      %p76 = scmp.eq.s32.totalorder %s17, 1
      %p77 = por %p75, %p76
      %p78 = scmp.ne.s32.totalorder %s69, %s70
      %p79 = scmp.eq.s32.totalorder %s17, 0
      %p80 = por %p78, %p79
      %p81 = scmp.ne.s32.totalorder %s69, %s70
      %p82 = scmp.eq.s32.totalorder %s18, 1
      %p83 = por %p81, %p82
      %p85 = scmp.ne.s32.totalorder %s70, %s84
      %p86 = scmp.eq.s32.totalorder %s18, 0
      %p87 = por %p85, %p86
      %s88 = ssub.s32 %s12, %s19
      %p89 = scmp.eq.s32.totalorder %s88, 0
      %s91 = sadd.s32 %s90, 1
      %s92 = scalar_select %p89, %s90, %s91
      %p95 = pneg %p89
      %p96 = scmp.eq.s32.totalorder %s12, 1
      %p97 = por %p95, %p96
      %p98 = scmp.ne.s32.totalorder %s90, %s93
      %p99 = scmp.eq.s32.totalorder %s12, 0
      %p100 = por %p98, %p99
      %p101 = scmp.ne.s32.totalorder %s90, %s93
      %p102 = scmp.eq.s32.totalorder %s17, 1
      %p103 = por %p101, %p102
      %p104 = scmp.ne.s32.totalorder %s93, %s94
      %p105 = scmp.eq.s32.totalorder %s17, 0
      %p106 = por %p104, %p105
      %p107 = scmp.ne.s32.totalorder %s93, %s94
      %p108 = scmp.eq.s32.totalorder %s18, 1
      %p109 = por %p107, %p108
      %p111 = scmp.ne.s32.totalorder %s94, %s110
      %p112 = scmp.eq.s32.totalorder %s18, 0
      %p113 = por %p111, %p112
      %p114 = scmp.le.s32.totalorder 1, %s12
      %p115 = scmp.lt.s32.totalorder %s12, 3
      %p116 = pnand %p114, %p115
      %p117 = pneg %p116
      // Predicated region
      $region9: #{fwd.1} parent=5 // pred_check
        _
      $region10: #{fwd.1} parent=5 // pred_check_branch
        %119 = sbr.rel (%p116) target = $region12
      $region11: #{fwd.1} parent=5 // pred_region
        %s120 = ssub.s32 %s12, 1
        // Predicated region
        $region13: #{fwd.1} parent=11 // pred_check
          %p121 = pneg %p59
        $region14: #{fwd.1} parent=11 // pred_check_branch
          %123 = sbr.rel (%p121) target = $region16
        $region15: #{fwd.1} parent=11 // pred_region
          _
        $region16: #{fwd.1} parent=11 // pred_fallthru
          _
        // Predicated region
        $region17: #{fwd.1} parent=11 // pred_check
          %p124 = pneg %p80
        $region18: #{fwd.1} parent=11 // pred_check_branch
          %126 = sbr.rel (%p124) target = $region20
        $region19: #{fwd.1} parent=11 // pred_region
          _
        $region20: #{fwd.1} parent=11 // pred_fallthru
          _
      $region12: #{fwd.1} parent=5 // pred_fallthru
        _
      %p127 = scmp.lt.s32.totalorder %s12, 2
      // Predicated region
      $region21: #{fwd.1} parent=5 // pred_check
        %p128 = pneg %p127
      $region22: #{fwd.1} parent=5 // pred_check_branch
        %130 = sbr.rel (%p128) target = $region24
      $region23: #{fwd.1} parent=5 // pred_region
        // Predicated region
        $region25: #{fwd.1} parent=23 // pred_check
          %p131 = pneg %p32
        $region26: #{fwd.1} parent=23 // pred_check_branch
          %133 = sbr.rel (%p131) target = $region28
        $region27: #{fwd.1} parent=23 // pred_region
          %p134 = scmp.lt.s32.totalorder %s12, 1
          %s135 = scalar_select %p134, %s12, 1
          %s136 = smul.addr %s135, 4
          %s137 = smul.addr %s136, 8
          %s138 = scalar_lea.vmem %s0, %s137
        $region28: #{fwd.1} parent=23 // pred_fallthru
          _
      $region24: #{fwd.1} parent=5 // pred_fallthru
        _
      %p139 = scmp.le.s32.totalorder 1, %s12
      %p140 = scmp.lt.s32.totalorder %s12, 3
      %p141 = pnand %p139, %p140
      %p142 = pneg %p141
      // Predicated region
      $region29: #{fwd.1} parent=5 // pred_check
        _
      $region30: #{fwd.1} parent=5 // pred_check_branch
        %144 = sbr.rel (%p141) target = $region32
      $region31: #{fwd.1} parent=5 // pred_region
        %s145 = ssub.s32 %s12, 1
        %p146 = scmp.lt.s32.totalorder %s17, 1
        %s147 = scalar_select %p146, %s17, 1
        %s148 = smul.addr %s147, 4
        %s149 = smul.addr %s148, 8
        %s150 = scalar_lea.vmem %s0, %s149
        %p151 = pneg %p38
        %p152 = pneg %p35
        %p153 = pneg %p59
        %p154 = pneg %p56
        %p155 = pneg %p80
        %p156 = pneg %p77
        %p157 = pneg %p106
        %p158 = pneg %p103
        %s159 = sand.u32 %s93, 1
        %s160 = scalar_lea.sflag [#allocation3], %s159
        %s161 = sand.u32 %s93, 1
        %s162 = smul.addr %s161, 32
        %s163 = scalar_lea.vmem [#allocation2], %s162
        %p164 = scmp.lt.s32.totalorder %s17, 1
        %s165 = scalar_select %p164, %s17, 1
        %s166 = smul.addr %s165, 4
        %s167 = smul.addr %s166, 8
        %s168 = scalar_lea.vmem %s0, %s167
        %v169 = vld [vmem:[%s168] sm:$0xff]
        %v170 = vld [vmem:[%s168 + $0x8] sm:$0xff]
        %v171 = vld [vmem:[%s168 + $0x10] sm:$0xff]
        %v172 = vld [vmem:[%s168 + $0x18] sm:$0xff]
        %v173 = vadd.f32 %v169, %v170
        %v174 = vadd.f32 %v173, %v171
        %v175 = vadd.f32 %v174, %v172
        %176 = vadd.xlane.f32.xlu0 %v175
        %v177 = vpop.xlane.xlu0 %176
        %v178 = vrcp.pop 512.0
        %v179 = vmul.f32 %v177, %v178
        %v180 = vsub.f32 %v169, %v179
        %v181 = vsub.f32 %v170, %v179
        %v182 = vsub.f32 %v171, %v179
        %v183 = vsub.f32 %v172, %v179
        %v184 = vmul.f32 %v180, %v180
        %v185 = vmul.f32 %v181, %v181
        %v186 = vmul.f32 %v182, %v182
        %v187 = vmul.f32 %v183, %v183
        %v188 = vadd.f32 %v184, %v185
        %v189 = vadd.f32 %v188, %v186
        %v190 = vadd.f32 %v189, %v187
        %191 = vadd.xlane.f32.xlu0 %v190
        %v192 = vpop.xlane.xlu0 %191
        %v193 = vmul.f32 %v192, %v178
        %v194 = vadd.f32 %v193, 1e-05
        %v195 = vrsqrt.pop %v194
        %v196 = vmul.f32 %v180, %v195
        %v197 = vmul.f32 %v181, %v195
        %v198 = vmul.f32 %v182, %v195
        %v199 = vmul.f32 %v183, %v195
        %v200 = vld [vmem:[%s1] sm:$0xf]
        %v202 = vlaneseq
        %v203 = vshrl.u32 %v202, 7
        %v204 = vsub.s32 0, %v203
        %v205 = vrot.slane %v200, %v204
        %v206 = vlaneseq
        %v207 = vshrl.u32 %v206, 7
        %v208 = vsub.s32 1, %v207
        %v209 = vrot.slane %v200, %v208
        %v210 = vlaneseq
        %v211 = vshrl.u32 %v210, 7
        %v212 = vsub.s32 2, %v211
        %v213 = vrot.slane %v200, %v212
        %v214 = vlaneseq
        %v215 = vshrl.u32 %v214, 7
        %v216 = vsub.s32 3, %v215
        %v217 = vrot.slane %v200, %v216
        %v222 = vmul.f32 %v196, %v205
        %v223 = vmul.f32 %v197, %v209
        %v224 = vmul.f32 %v198, %v213
        %v225 = vmul.f32 %v199, %v217
        %v226 = vld [vmem:[%s2] sm:$0xf]
        %v228 = vlaneseq
        %v229 = vshrl.u32 %v228, 7
        %v230 = vsub.s32 0, %v229
        %v231 = vrot.slane %v226, %v230
        %v232 = vlaneseq
        %v233 = vshrl.u32 %v232, 7
        %v234 = vsub.s32 1, %v233
        %v235 = vrot.slane %v226, %v234
        %v236 = vlaneseq
        %v237 = vshrl.u32 %v236, 7
        %v238 = vsub.s32 2, %v237
        %v239 = vrot.slane %v226, %v238
        %v240 = vlaneseq
        %v241 = vshrl.u32 %v240, 7
        %v242 = vsub.s32 3, %v241
        %v243 = vrot.slane %v226, %v242
        %v248 = vadd.f32 %v222, %v231
        %v249 = vadd.f32 %v223, %v235
        %v250 = vadd.f32 %v224, %v239
        %v251 = vadd.f32 %v225, %v243
        %252 = vst [vmem:[%s163] sm:$0xff] %v248
        %253 = vst [vmem:[%s163 + $0x8] sm:$0xff] %v249
        %254 = vst [vmem:[%s163 + $0x10] sm:$0xff] %v250
        %255 = vst [vmem:[%s163 + $0x18] sm:$0xff] %v251
        %s256 = sand.u32 %s93, 1
        %s257 = scalar_lea.sflag [#allocation3], %s256
        %s258 = sand.u32 %s93, 1
        %s259 = smul.addr %s258, 32
        %s260 = scalar_lea.vmem [#allocation2], %s259
        // Predicated region
        $region33: #{fwd.1} parent=31 // pred_check
          %p261 = pneg %p103
        $region34: #{fwd.1} parent=31 // pred_check_branch
          %263 = sbr.rel (%p261) target = $region36
        $region35: #{fwd.1} parent=31 // pred_region
          %s265 = ssub.s32 512, 512
          %266 = vsyncadd %s257, %s265
          %s267 = smul.addr %s17, 4
          %s268 = smul.addr %s267, 128
          %s269 = scalar_lea.hbm %s3, %s268
          %s271 = sshll.u32 %s260, 4
          %s272 = int_to_ptr.vmem [resolvable:$true] %s271
          %274 = dma.vmem_to_hbm [thread:$0]  %s272, 512, %s269, %s257
        $region36: #{fwd.1} parent=31 // pred_fallthru
          _
      $region32: #{fwd.1} parent=5 // pred_fallthru
        _
      %p275 = scmp.le.s32.totalorder 2, %s12
      // Predicated region
      $region37: #{fwd.1} parent=5 // pred_check
        %p276 = pneg %p275
      $region38: #{fwd.1} parent=5 // pred_check_branch
        %278 = sbr.rel (%p276) target = $region40
      $region39: #{fwd.1} parent=5 // pred_region
        %s279 = ssub.s32 %s12, 2
        // Predicated region
        $region41: #{fwd.1} parent=39 // pred_check
          %p280 = pneg %p109
        $region42: #{fwd.1} parent=39 // pred_check_branch
          %282 = sbr.rel (%p280) target = $region44
        $region43: #{fwd.1} parent=39 // pred_region
          %s283 = sand.u32 %s94, 1
          %s284 = scalar_lea.sflag [#allocation3], %s283
          %s285 = sand.u32 %s94, 1
          %s286 = smul.addr %s285, 32
          %s287 = scalar_lea.vmem [#allocation2], %s286
          %288 = dma.done %s284, 512
        $region44: #{fwd.1} parent=39 // pred_fallthru
          _
      $region40: #{fwd.1} parent=5 // pred_fallthru
        _
    $region6: #{fwd.1} parent=1 // loop_footer
      %s16 = sadd.s32 1, %s12
    $region7: #{fwd.1} parent=1 // loop_footer_branch
      %11 = sbr.rel target = $region3
    $region8: #{fwd.1} parent=1 // loop_exit
      _
    %289 = vsyncpa [#allocation3], 1
    %s290 = scalar_lea.sflag [#allocation3], 1
    %291 = vsyncpa %s290, 1

</llo_original>
